<compile_context>
chip_gen: v7x
topology: tpu7x:2x2x1
jax: 0.10.0
libtpu: 0.0.40
codegen_flags: <defaults>
</compile_context>

<pallas_src>
import jax
import jax.numpy as jnp
from jax.experimental import pallas as pl
from jax.experimental.pallas import tpu as pltpu


def _round_up(x, m):
    return ((x + m - 1) // m) * m


def _sublane_multiple(dtype):
    return {4: 8, 2: 16, 1: 32}.get(jnp.dtype(dtype).itemsize, 8)


def _vmem_budget_bytes():
    """Per-core VMEM budget, generation-aware (~70% of physical capacity)."""
    cap = None
    try:
        info = pltpu.get_tpu_info()
        cap = getattr(info, "vmem_capacity_bytes", None)
    except Exception:
        cap = None
    if not cap:
        cap = 64 * 1024 * 1024  # conservative fallback: v7x per-TC physical VMEM
    return max(32 * 1024 * 1024, int(cap * 0.7))


def _vmem_usage(tm, tn, tk, grid_k, in_sz, out_sz):
    u = 2 * tm * tk * in_sz           # x tile, double-buffered
    u += 2 * tk * tn * in_sz          # W^T tile, double-buffered
    u += 2 * 8 * tn * 4               # bias (f32, sublane-padded)
    u += 2 * tm * tn * out_sz         # out tile, double-buffered
    if grid_k > 1:
        u += tm * tn * 4              # f32 accumulator scratch
    return u


# ----------------------------- kernels --------------------------------------


def _linear_kernel_direct(x_ref, w_ref, b_ref, o_ref):
    # Single K step: no accumulator scratch, no init/finalize passes.
    o_ref[...] = (jnp.dot(x_ref[...], w_ref[...],
                          preferred_element_type=jnp.float32)
                  + b_ref[...]).astype(o_ref.dtype)


def _linear_kernel_acc(x_ref, w_ref, b_ref, o_ref, acc_ref):
    k = pl.program_id(2)

    @pl.when(k == 0)
    def _():
        # Bias folded into the accumulator init (saves an epilogue VPU pass).
        acc_ref[...] = jnp.broadcast_to(b_ref[...], acc_ref.shape)

    acc_ref[...] += jnp.dot(x_ref[...], w_ref[...],
                            preferred_element_type=jnp.float32)

    @pl.when(k == pl.num_programs(2) - 1)
    def _():
        o_ref[...] = acc_ref[...].astype(o_ref.dtype)


# --------------------------- host-side wrapper -------------------------------


def prepare_classifier_params(weight, bias, compute_dtype=jnp.bfloat16):
    """One-time parameter preparation. Do NOT call per forward pass.

    weight: (num_labels, input_dim) -> padded, transposed (D_pad, L_pad)
    bias:   (num_labels,)           -> padded (1, L_pad) float32
    Returns (w_t, b, meta) with meta = (input_dim, num_labels, tk, tn).
    """
    L, D = weight.shape
    budget = _vmem_budget_bytes()
    tight = budget < 60 * 1024 * 1024        # v7x-class VMEM (64 MiB physical)

    # Label tile (lane dim): 512 where VMEM allows, 256 on tight-VMEM chips.
    L128 = _round_up(L, 128)
    tn = min(256 if tight else 512, L128)
    L_pad = _round_up(L, tn)

    # K tile: a single K step for modest hidden dims, otherwise tile K.
    D128 = _round_up(D, 128)
    single_k_limit = 1024 if tight else 2048
    tk = D128 if D128 <= single_k_limit else (256 if tight else 512)
    D_pad = _round_up(D, tk)

    w_t = jnp.pad(weight.T.astype(compute_dtype),
                  ((0, D_pad - D), (0, L_pad - L)))
    b = jnp.pad(bias.astype(jnp.float32), (0, L_pad - L)).reshape(1, L_pad)
    meta = (D, L, tk, tn)
    return w_t, b, meta


def classifier_forward(x, w_t, b, meta, *, out_dtype=None):
    """x: (..., input_dim); w_t/b/meta from prepare_classifier_params."""
    D, L, tk, tn = meta
    D_pad, L_pad = w_t.shape
    grid_k = D_pad // tk
    grid_n = L_pad // tn

    assert x.shape[-1] == D, "input feature dim mismatch"
    lead_shape = x.shape[:-1]
    x2 = x.reshape(-1, D)
    B = x2.shape[0]

    out_dtype = jnp.dtype(out_dtype) if out_dtype is not None else x.dtype
    in_sz = jnp.dtype(w_t.dtype).itemsize
    out_sz = jnp.dtype(out_dtype).itemsize
    sub = _sublane_multiple(w_t.dtype)
    budget = _vmem_budget_bytes()

    # Largest batch-tile cap that fits the VMEM budget: minimizes grid_m, i.e.
    # how many times W^T is re-streamed from HBM.
    tm_cap = sub
    for cap in (2048, 1024, 512, 256, 128, 64, 32, 16, 8):
        if cap < sub:
            continue
        if _vmem_usage(cap, tn, tk, grid_k, in_sz, out_sz) <= budget:
            tm_cap = cap
            break

    # Balanced batch tiles (avoid pad blow-up, e.g. B=520 -> tm=264, not 512).
    grid_m = pl.cdiv(B, tm_cap)
    tm = _round_up(pl.cdiv(B, grid_m), sub)
    B_pad = grid_m * tm

    # Activation prep: cast only if needed, pad only dims that need it.
    x_p = x2 if x2.dtype == w_t.dtype else x2.astype(w_t.dtype)
    pad_b, pad_d = B_pad - B, D_pad - D
    if pad_b or pad_d:
        x_p = jnp.pad(x_p, ((0, pad_b), (0, pad_d)))

    if grid_k == 1:
        kernel = _linear_kernel_direct
        grid = (grid_m, grid_n)
        in_specs = [
            pl.BlockSpec((tm, tk), lambda i, n: (i, 0)),     # x tile
            pl.BlockSpec((tk, tn), lambda i, n: (0, n)),     # W^T tile
            pl.BlockSpec((1, tn), lambda i, n: (0, n)),      # bias tile
        ]
        out_specs = pl.BlockSpec((tm, tn), lambda i, n: (i, n))
        scratch_shapes = []
        dim_sem = ("parallel", "parallel")
    else:
        kernel = _linear_kernel_acc
        grid = (grid_m, grid_n, grid_k)
        in_specs = [
            pl.BlockSpec((tm, tk), lambda i, n, k: (i, k)),  # x tile
            pl.BlockSpec((tk, tn), lambda i, n, k: (k, n)),  # W^T tile
            pl.BlockSpec((1, tn), lambda i, n, k: (0, n)),   # bias tile
        ]
        out_specs = pl.BlockSpec((tm, tn), lambda i, n, k: (i, n))
        scratch_shapes = [pltpu.VMEM((tm, tn), jnp.float32)]
        dim_sem = ("parallel", "parallel", "arbitrary")

    actual_vmem = _vmem_usage(tm, tn, tk, grid_k, in_sz, out_sz)
    vmem_limit = int(max(budget, actual_vmem + (4 << 20)))

    cost = pl.CostEstimate(
        flops=2 * B_pad * D_pad * L_pad,
        transcendentals=0,
        bytes_accessed=(grid_n * B_pad * D_pad * in_sz      # x streamed per N tile
                        + grid_m * D_pad * L_pad * in_sz    # W streamed per M tile
                        + 8 * L_pad * 4                     # bias
                        + B_pad * L_pad * out_sz),          # output writeback
    )

    out = pl.pallas_call(
        kernel,
        out_shape=jax.ShapeDtypeStruct((B_pad, L_pad), out_dtype),
        grid_spec=pltpu.PrefetchScalarGridSpec(
            num_scalar_prefetch=0,
            grid=grid,
            in_specs=in_specs,
            out_specs=out_specs,
            scratch_shapes=scratch_shapes,
        ),
        compiler_params=pltpu.CompilerParams(
            dimension_semantics=dim_sem,
            vmem_limit_bytes=vmem_limit,
        ),
        cost_estimate=cost,
    )(x_p, w_t, b)

    return out[:B, :L].reshape(lead_shape + (L,))


if __name__ == "__main__":
    key = jax.random.PRNGKey(0)
    keys = jax.random.split(key, 6)

    def make_case(kx, kw, kb, B, D, L):
        x = jax.random.normal(kx, (B, D), dtype=jnp.float32)
        bound = 1.0 / (D ** 0.5)       # mimic torch.nn.Linear init
        w = jax.random.uniform(kw, (L, D), jnp.float32, -bound, bound)
        b = jax.random.uniform(kb, (L,), jnp.float32, -bound, bound)
        return x, w, b

    # Case 1: tiny shapes from the module spec (single-K, single-N, direct kernel).
    batch, input_dim, num_labels = 8, 32, 16
    x, weight, bias = make_case(keys[0], keys[1], keys[2],
                                batch, input_dim, num_labels)
    ref = x @ weight.T + bias

    w32, b32, meta32 = prepare_classifier_params(weight, bias,
                                                 compute_dtype=jnp.float32)
    out_f32 = classifier_forward(x, w32, b32, meta32)
    jax.block_until_ready(out_f32)
    assert out_f32.shape == (batch, num_labels)
    assert jnp.allclose(out_f32, ref, atol=1e-5, rtol=1e-5), "f32 mismatch"

    wbf, bbf, metabf = prepare_classifier_params(weight, bias,
                                                 compute_dtype=jnp.bfloat16)
    out_bf16 = classifier_forward(x, wbf, bbf, metabf, out_dtype=jnp.bfloat16)
    jax.block_until_ready(out_bf16)
    assert out_bf16.shape == (batch, num_labels)
    assert out_bf16.dtype == jnp.bfloat16
    assert jnp.allclose(out_bf16.astype(jnp.float32), ref,
                        atol=6e-2, rtol=6e-2), "bf16 mismatch"

    # Case 2: larger head that exercises K-tiling, N-tiling and padding slicing
    # (grid_k > 1, grid_n > 1 -> accumulator kernel path).
    B2, D2, L2 = 40, 2500, 600
    x2, w2, b2 = make_case(keys[3], keys[4], keys[5], B2, D2, L2)
    ref2 = x2 @ w2.T + b2

    w2p, b2p, meta2 = prepare_classifier_params(w2, b2, compute_dtype=jnp.float32)
    out2 = classifier_forward(x2, w2p, b2p, meta2)
    jax.block_until_ready(out2)
    assert out2.shape == (B2, L2)
    # Loose tolerance: MXU f32 multipass vs XLA reference precision may differ.
    assert jnp.allclose(out2, ref2, atol=1e-2, rtol=1e-2), "tiled-path mismatch"

    print("KERNEL_OK")
</pallas_src>

<mosaic_0001>
module attributes {stable_mosaic.version = 11 : i64} {
  func.func @_linear_kernel_direct(%arg0: i32, %arg1: i32, %arg2: memref<8x128xf32, #tpu.memory_space<vmem>>, %arg3: memref<128x128xf32, #tpu.memory_space<vmem>>, %arg4: memref<1x128xf32, #tpu.memory_space<vmem>>, %arg5: memref<8x128xf32, #tpu.memory_space<vmem>>) attributes {dimension_semantics = [#tpu.dimension_semantics<parallel>, #tpu.dimension_semantics<parallel>], iteration_bounds = array<i64: 1, 1>, scalar_prefetch = 0 : i64, scratch_operands = 0 : i64, tpu.core_type = #tpu.core_type<tc>, window_params = [{transform_indices = @transform_0, window_bounds = array<i64: 8, 128>}, {transform_indices = @transform_1, window_bounds = array<i64: 128, 128>}, {transform_indices = @transform_2, window_bounds = array<i64: 1, 128>}, {transform_indices = @transform_3, window_bounds = array<i64: 8, 128>}]} {
    %c0 = arith.constant 0 : index
    %c0_0 = arith.constant 0 : index
    %0 = vector.load %arg2[%c0, %c0_0] : memref<8x128xf32, #tpu.memory_space<vmem>>, vector<8x128xf32>
    %c0_1 = arith.constant 0 : index
    %c0_2 = arith.constant 0 : index
    %1 = vector.load %arg3[%c0_1, %c0_2] : memref<128x128xf32, #tpu.memory_space<vmem>>, vector<128x128xf32>
    %cst = arith.constant dense<0.000000e+00> : vector<8x128xf32>
    %2 = tpu.matmul %0, %1, %cst {dimension_numbers = #tpu.dot_dimension_numbers<[1], [0], [0], [1], [0, 0, 1, 1], [], []>} : vector<8x128xf32>, vector<128x128xf32>, vector<8x128xf32> -> vector<8x128xf32>
    %c0_3 = arith.constant 0 : index
    %c0_4 = arith.constant 0 : index
    %3 = vector.load %arg4[%c0_3, %c0_4] : memref<1x128xf32, #tpu.memory_space<vmem>>, vector<1x128xf32>
    %4 = vector.broadcast %3 : vector<1x128xf32> to vector<8x128xf32>
    %5 = arith.addf %2, %4 : vector<8x128xf32>
    %c0_5 = arith.constant 0 : index
    %c0_6 = arith.constant 0 : index
    %6 = vector.load %arg5[%c0_5, %c0_6] : memref<8x128xf32, #tpu.memory_space<vmem>>, vector<8x128xf32>
    tpu.vector_store %arg5[%c0_5, %c0_6], %5 {strides = array<i32>} : memref<8x128xf32, #tpu.memory_space<vmem>>, vector<8x128xf32>,
    return
  }
  func.func @transform_0(%arg0: i32, %arg1: i32) -> (i32, i32) {
    %c0_i32 = arith.constant 0 : i32
    %c0_i32_0 = arith.constant 0 : i32
    return %arg0, %c0_i32 : i32, i32
  }
  func.func @transform_1(%arg0: i32, %arg1: i32) -> (i32, i32) {
    %c0_i32 = arith.constant 0 : i32
    %c0_i32_0 = arith.constant 0 : i32
    return %c0_i32, %arg1 : i32, i32
  }
  func.func @transform_2(%arg0: i32, %arg1: i32) -> (i32, i32) {
    %c0_i32 = arith.constant 0 : i32
    %c0_i32_0 = arith.constant 0 : i32
    return %c0_i32, %arg1 : i32, i32
  }
  func.func @transform_3(%arg0: i32, %arg1: i32) -> (i32, i32) {
    %c0_i32 = arith.constant 0 : i32
    return %arg0, %arg1 : i32, i32
  }
}

</mosaic_0001>

<llo_original>
// kernel: tpu_custom_call.1
$region0: #{tpu_custom_call.1}
  #allocation0 [shape = 'u32[]', space=smem, size = 0x4, offset = 0x4, fixed_abs, tag = 'smem constant byte address 0x4 - core index']
  #allocation1 [shape = 'u32[144,128]{1,0:T(1,128)}', space=vmem, size = 0x12000, scoped, tag = 'internal scratch']
  %s0 = inlined_call_operand.hbm [shape: f32[8,128], index: 0, kind: input, shape index: {}]
  %s1 = inlined_call_operand.hbm [shape: f32[128,128], index: 1, kind: input, shape index: {}]
  %s2 = inlined_call_operand.vmem [shape: f32[1,128], index: 2, kind: input, shape index: {}]
  %s3 = inlined_call_operand.hbm [shape: f32[8,128], index: 3, kind: output, shape index: {}]
  %s4 = sld [smem:[#allocation0]]
  $region30: #{tpu_custom_call.1} parent=0
    _
  %s6 = ssub.s32 1, %s4
  %s7 = scalar_select 0, %s6, %s4
  $region1: #{tpu_custom_call.1} parent=0
    #allocation2 [shape = 'u8[4096]{0}', space=vmem, size = 0x1000, scoped, tag = 'input window, operand 0, single buffered']
    #allocation3 [shape = 's32[1]{0}', space=sflag, size = 0x4, scoped, tag = 'scoped memory for tpu_custom_call.1']
    #allocation4 [shape = 's32[1]{0}', space=sflag, size = 0x4, scoped, tag = 'scoped memory for tpu_custom_call.1']
    #allocation5 [shape = 'u8[65536]{0}', space=vmem, size = 0x10000, scoped, tag = 'input window, operand 1, single buffered']
    #allocation6 [shape = 's32[1]{0}', space=sflag, size = 0x4, scoped, tag = 'scoped memory for tpu_custom_call.1']
    #allocation7 [shape = 'u8[4096]{0}', space=vmem, size = 0x1000, scoped, tag = 'output window, operand 0, single buffered']
    %8 = vsyncpa [#allocation3], 0
    %9 = vsyncpa [#allocation6], 0
    %10 = vsyncpa [#allocation4], 0
    // Predicated region
    $region2: #{tpu_custom_call.1} parent=1 // pred_check
      _
    $region3: #{tpu_custom_call.1} parent=1 // pred_check_branch
      %12 = sbr.rel (0) target = $region5
    $region4: #{tpu_custom_call.1} parent=1 // pred_region
      %s14 = ssub.s32 128, 128
      %15 = vsyncadd [#allocation3], %s14
      %s17 = sshll.u32 [#allocation2], 4
      %s18 = int_to_ptr.vmem [resolvable:$true] %s17
      %20 = dma.hbm_to_vmem [thread:$0]  %s0, 128, %s18, [#allocation3]
    $region5: #{tpu_custom_call.1} parent=1 // pred_fallthru
      _
    // Predicated region
    $region6: #{tpu_custom_call.1} parent=1 // pred_check
      _
    $region7: #{tpu_custom_call.1} parent=1 // pred_check_branch
      %22 = sbr.rel (0) target = $region9
    $region8: #{tpu_custom_call.1} parent=1 // pred_region
      %s24 = ssub.s32 2048, 2048
      %25 = vsyncadd [#allocation6], %s24
      %s26 = sshll.u32 [#allocation5], 4
      %s27 = int_to_ptr.vmem [resolvable:$true] %s26
      %32 = dma.hbm_to_vmem [thread:$0]  %s1, 2048, %s27, [#allocation6], 128, 128, 8
    $region9: #{tpu_custom_call.1} parent=1 // pred_fallthru
      _
    // Predicated region
    $region10: #{tpu_custom_call.1} parent=1 // pred_check
      _
    $region11: #{tpu_custom_call.1} parent=1 // pred_check_branch
      %34 = sbr.rel (0) target = $region13
    $region12: #{tpu_custom_call.1} parent=1 // pred_region
      _
    $region13: #{tpu_custom_call.1} parent=1 // pred_fallthru
      _
    // Predicated region
    $region14: #{tpu_custom_call.1} parent=1 // pred_check
      _
    $region15: #{tpu_custom_call.1} parent=1 // pred_check_branch
      %36 = sbr.rel (0) target = $region17
    $region16: #{tpu_custom_call.1} parent=1 // pred_region
      %37 = dma.done [#allocation3], 128
    $region17: #{tpu_custom_call.1} parent=1 // pred_fallthru
      _
    // Predicated region
    $region18: #{tpu_custom_call.1} parent=1 // pred_check
      _
    $region19: #{tpu_custom_call.1} parent=1 // pred_check_branch
      %39 = sbr.rel (0) target = $region21
    $region20: #{tpu_custom_call.1} parent=1 // pred_region
      %40 = dma.done [#allocation6], 2048
    $region21: #{tpu_custom_call.1} parent=1 // pred_fallthru
      _
    %v41 = vld [vmem:[#allocation2] sm:$0xff]
    %v42 = vld [vmem:[#allocation5] sm:$0xff]
    %v43 = vld [vmem:[#allocation5 + $0x8] sm:$0xff]
    %v44 = vld [vmem:[#allocation5 + $0x10] sm:$0xff]
    %v45 = vld [vmem:[#allocation5 + $0x18] sm:$0xff]
    %v46 = vld [vmem:[#allocation5 + $0x20] sm:$0xff]
    %v47 = vld [vmem:[#allocation5 + $0x28] sm:$0xff]
    %v48 = vld [vmem:[#allocation5 + $0x30] sm:$0xff]
    %v49 = vld [vmem:[#allocation5 + $0x38] sm:$0xff]
    %v50 = vld [vmem:[#allocation5 + $0x40] sm:$0xff]
    %v51 = vld [vmem:[#allocation5 + $0x48] sm:$0xff]
    %v52 = vld [vmem:[#allocation5 + $0x50] sm:$0xff]
    %v53 = vld [vmem:[#allocation5 + $0x58] sm:$0xff]
    %v54 = vld [vmem:[#allocation5 + $0x60] sm:$0xff]
    %v55 = vld [vmem:[#allocation5 + $0x68] sm:$0xff]
    %v56 = vld [vmem:[#allocation5 + $0x70] sm:$0xff]
    %v57 = vld [vmem:[#allocation5 + $0x78] sm:$0xff]
    %v58 = vld [vmem:[%s2] sm:$0x1]
    %v60 = vlaneseq
    %v61 = vshrl.u32 %v60, 7
    %v62 = vsub.s32 0, %v61
    %v63 = vrot.slane %v58, %v62
    %65 = vmatprep.subr.mxu0 0.0
    %66 = vmatpush1.msra.mxu0 %v42
    %67 = vmatprep.subr.mxu0 0.0
    %68 = vmatpush1.msra.mxu0 %v43
    %69 = vmatprep.subr.mxu0 0.0
    %70 = vmatpush1.msra.mxu0 %v44
    %71 = vmatprep.subr.mxu0 0.0
    %72 = vmatpush1.msra.mxu0 %v45
    %73 = vmatprep.subr.mxu0 0.0
    %74 = vmatpush1.msra.mxu0 %v46
    %75 = vmatprep.subr.mxu0 0.0
    %76 = vmatpush1.msra.mxu0 %v47
    %77 = vmatprep.subr.mxu0 0.0
    %78 = vmatpush1.msra.mxu0 %v48
    %79 = vmatprep.subr.mxu0 0.0
    %80 = vmatpush1.msra.mxu0 %v49
    %81 = vmatprep.subr.mxu0 0.0
    %82 = vmatpush1.msra.mxu0 %v50
    %83 = vmatprep.subr.mxu0 0.0
    %84 = vmatpush1.msra.mxu0 %v51
    %85 = vmatprep.subr.mxu0 0.0
    %86 = vmatpush1.msra.mxu0 %v52
    %87 = vmatprep.subr.mxu0 0.0
    %88 = vmatpush1.msra.mxu0 %v53
    %89 = vmatprep.subr.mxu0 0.0
    %90 = vmatpush1.msra.mxu0 %v54
    %91 = vmatprep.subr.mxu0 0.0
    %92 = vmatpush1.msra.mxu0 %v55
    %93 = vmatprep.subr.mxu0 0.0
    %94 = vmatpush1.msra.mxu0 %v56
    %95 = vmatprep.subr.mxu0 0.0
    %96 = vmatpush1.msra.mxu0 %v57
    %97 = vmatprep.subr.mxu0 0.0
    %98 = vmatpush1.msra.mxu0 0.0
    %99 = vmatprep.subr.mxu0 0.0
    %100 = vmatpush1.msra.mxu0 0.0
    %101 = vmatprep.subr.mxu0 0.0
    %102 = vmatpush1.msra.mxu0 0.0
    %103 = vmatprep.subr.mxu0 0.0
    %104 = vmatpush1.msra.mxu0 0.0
    %105 = vmatprep.subr.mxu0 0.0
    %106 = vmatpush1.msra.mxu0 0.0
    %107 = vmatprep.subr.mxu0 0.0
    %108 = vmatpush1.msra.mxu0 0.0
    %109 = vmatprep.subr.mxu0 0.0
    %110 = vmatpush1.msra.mxu0 0.0
    %111 = vmatprep.subr.mxu0 0.0
    %112 = vmatpush1.msra.mxu0 0.0
    %113 = vmatprep.subr.mxu0 0.0
    %114 = vmatpush1.msra.mxu0 0.0
    %115 = vmatprep.subr.mxu0 0.0
    %116 = vmatpush1.msra.mxu0 0.0
    %117 = vmatprep.subr.mxu0 0.0
    %118 = vmatpush1.msra.mxu0 0.0
    %119 = vmatprep.subr.mxu0 0.0
    %120 = vmatpush1.msra.mxu0 0.0
    %121 = vmatprep.subr.mxu0 0.0
    %122 = vmatpush1.msra.mxu0 0.0
    %123 = vmatprep.subr.mxu0 0.0
    %124 = vmatpush1.msra.mxu0 0.0
    %125 = vmatprep.subr.mxu0 0.0
    %126 = vmatpush1.msra.mxu0 0.0
    %127 = vmatprep.subr.mxu0 0.0
    %128 = vmatpush1.msra.mxu0 0.0
    %129 = vmatprep.mubr.f32.mxu0 0.0
    %130 = vmatmul.mubr.f32.gmra.mrb[0].mxu0 %v41
    %v131 = vpop.f32.mrb[0].mxu0
    %v132 = vadd.f32 %v63, %v131
    %v133 = vpop.f32.mrb[0].mxu0
    %134 = vdwg.mxu0
    %135 = vst [vmem:[#allocation7] sm:$0xff] %v132
    // Predicated region
    $region22: #{tpu_custom_call.1} parent=1 // pred_check
      _
    $region23: #{tpu_custom_call.1} parent=1 // pred_check_branch
      %137 = sbr.rel (0) target = $region25
    $region24: #{tpu_custom_call.1} parent=1 // pred_region
      %s139 = ssub.s32 128, 128
      %140 = vsyncadd [#allocation4], %s139
      %s142 = sshll.u32 [#allocation7], 4
      %s143 = int_to_ptr.vmem [resolvable:$true] %s142
      %145 = dma.vmem_to_hbm [thread:$0]  %s143, 128, %s3, [#allocation4]
    $region25: #{tpu_custom_call.1} parent=1 // pred_fallthru
      _
    // Predicated region
    $region26: #{tpu_custom_call.1} parent=1 // pred_check
      _
    $region27: #{tpu_custom_call.1} parent=1 // pred_check_branch
      %147 = sbr.rel (0) target = $region29
    $region28: #{tpu_custom_call.1} parent=1 // pred_region
      %148 = dma.done [#allocation4], 128
    $region29: #{tpu_custom_call.1} parent=1 // pred_fallthru
      _
    %149 = vsyncpa [#allocation3], 1
    %150 = vsyncpa [#allocation6], 1
    %151 = vsyncpa [#allocation4], 1

</llo_original>
